<compile_context>
chip_gen: v7x
topology: tpu7x:2x2x1
jax: 0.10.0
libtpu: 0.0.40
codegen_flags: <defaults>
</compile_context>

<pallas_src>
import jax
import jax.numpy as jnp
from jax.experimental import pallas as pl
from jax.experimental.pallas import tpu as pltpu


# ---- model hyper-params (small, consistent with the module's __init__) ------
FFT_CHANNELS = 32   # config.fft_channels  -> input feature size
NHID = 32           # hparams.nhid
NLAYERS = 2         # hparams.nlayers
BATCH = 8

assert FFT_CHANNELS == NHID, "packed weight slab assumes fft_channels == nhid"

N_SLABS = NLAYERS + 2  # [0]=input_fc, [1..NLAYERS]=hidden, [-1]=output_fc (row-padded)


def mlp_encoder_kernel(xT_ref, w_ref, b_ref, o_ref):
    """Transposed-layout MLP: batch lives on the lane axis.

    xT_ref: (NHID, Bt)            input tile (x transposed)
    w_ref : (N_SLABS, NHID, NHID) weights in (out, in) layout (resident)
    b_ref : (N_SLABS, NHID, 1)    biases as columns (broadcast over lanes)
    o_ref : (1, Bt)               real output channel only
    """
    # input projection + relu
    h = jnp.dot(w_ref[0], xT_ref[...], preferred_element_type=jnp.float32)
    h = jnp.maximum(h + b_ref[0], 0.0)

    # hidden layers (static unrolled loop; NLAYERS is a compile-time constant)
    for l in range(NLAYERS):
        h = jnp.dot(w_ref[1 + l], h, preferred_element_type=jnp.float32)
        h = jnp.maximum(h + b_ref[1 + l], 0.0)

    # output projection: only row 0 of the padded output weight is real,
    # so apply bias + tanh to that single row and store a (1, Bt) result.
    y = jnp.dot(w_ref[N_SLABS - 1], h, preferred_element_type=jnp.float32)
    o_ref[...] = jnp.tanh(y[:1, :] + b_ref[N_SLABS - 1, :1, :])


def _round_up(n, m):
    return ((n + m - 1) // m) * m


def encoder_forward(x, params, *, batch_tile=4096):
    """x: (B, FFT_CHANNELS) float32 -> (B, 1) float32."""
    w_slab, b_slab = params
    B = x.shape[0]

    # Lane-aligned batch tile: at least 128 lanes, at most batch_tile rows.
    tile = min(batch_tile, _round_up(B, 128))
    n_tiles = pl.cdiv(B, tile)
    B_pad = n_tiles * tile

    # Transpose so batch is the lane axis; zero-pad to a whole number of tiles.
    xT = jnp.zeros((FFT_CHANNELS, B_pad), jnp.float32).at[:, :B].set(x.T)

    yT_pad = pl.pallas_call(
        mlp_encoder_kernel,
        out_shape=jax.ShapeDtypeStruct((1, B_pad), jnp.float32),
        grid=(n_tiles,),
        in_specs=[
            pl.BlockSpec((FFT_CHANNELS, tile), lambda i: (0, i)),
            pl.BlockSpec((N_SLABS, NHID, NHID), lambda i: (0, 0, 0)),  # resident
            pl.BlockSpec((N_SLABS, NHID, 1), lambda i: (0, 0, 0)),     # resident
        ],
        out_specs=pl.BlockSpec((1, tile), lambda i: (0, i)),
        compiler_params=pltpu.CompilerParams(
            dimension_semantics=("parallel",)),
    )(xT, w_slab, b_slab)

    # (1, B_pad) -> (B, 1); padded columns are discarded.
    return jnp.transpose(yT_pad[:, :B])


def init_params(key):
    """Deterministic init mimicking nn.Linear (uniform +-1/sqrt(fan_in)),
    packed into a weight slab (N_SLABS, NHID, NHID) in (out, in) layout and a
    bias-column slab (N_SLABS, NHID, 1).  Output layer is zero-padded from
    1 row to NHID rows (only row 0 is real)."""
    ks = jax.random.split(key, 6)

    def uni(k, shape, fan_in):
        bound = 1.0 / jnp.sqrt(jnp.float32(fan_in))
        return jax.random.uniform(k, shape, jnp.float32, -bound, bound)

    w_in = uni(ks[0], (NHID, FFT_CHANNELS), FFT_CHANNELS)   # (out, in)
    b_in = uni(ks[1], (NHID,), FFT_CHANNELS)
    w_h = uni(ks[2], (NLAYERS, NHID, NHID), NHID)           # (out, in)
    b_h = uni(ks[3], (NLAYERS, NHID), NHID)
    w_out = uni(ks[4], (1, NHID), NHID)                     # (out, in)
    b_out = uni(ks[5], (1,), NHID)

    w_out_pad = jnp.zeros((NHID, NHID), jnp.float32).at[:1, :].set(w_out)
    b_out_pad = jnp.zeros((NHID,), jnp.float32).at[:1].set(b_out)

    w_slab = jnp.concatenate([w_in[None], w_h, w_out_pad[None]], axis=0)
    b_all = jnp.concatenate([b_in[None], b_h, b_out_pad[None]], axis=0)
    b_slab = b_all[:, :, None]                              # (N_SLABS, NHID, 1)
    return (w_slab, b_slab)


def encoder_reference(x, params):
    """Pure-JAX reference for correctness checking."""
    w_slab, b_slab = params
    h = jax.nn.relu(x @ w_slab[0].T + b_slab[0, :, 0])
    for l in range(NLAYERS):
        h = jax.nn.relu(h @ w_slab[1 + l].T + b_slab[1 + l, :, 0])
    return jnp.tanh(h @ w_slab[-1][:1, :].T + b_slab[-1, :1, 0])


if __name__ == "__main__":
    key = jax.random.PRNGKey(0)
    kx, kp = jax.random.split(key)
    params = init_params(kp)

    # small batch (module's native shape) -> single 128-lane tile
    x = jax.random.normal(kx, (BATCH, FFT_CHANNELS), dtype=jnp.float32)
    y = jax.block_until_ready(encoder_forward(x, params))
    y_ref = encoder_reference(x, params)
    assert y.shape == (BATCH, 1)
    assert jnp.allclose(y, y_ref, atol=1e-4, rtol=1e-4)

    # larger, non-multiple batch -> padded multi-tile pipelined path
    xb = jax.random.normal(kx, (4100, FFT_CHANNELS), dtype=jnp.float32)
    yb = jax.block_until_ready(encoder_forward(xb, params, batch_tile=2048))
    yb_ref = encoder_reference(xb, params)
    assert yb.shape == (4100, 1)
    assert jnp.allclose(yb, yb_ref, atol=1e-4, rtol=1e-4)

    print("KERNEL_OK")
</pallas_src>

<mosaic_0001>
module attributes {stable_mosaic.version = 11 : i64} {
  func.func @mlp_encoder_kernel(%arg0: i32, %arg1: memref<32x128xf32, #tpu.memory_space<vmem>>, %arg2: memref<4x32x32xf32, #tpu.memory_space<vmem>>, %arg3: memref<4x32x1xf32, #tpu.memory_space<vmem>>, %arg4: memref<1x128xf32, #tpu.memory_space<vmem>>) attributes {dimension_semantics = [#tpu.dimension_semantics<parallel>], iteration_bounds = array<i64: 1>, scalar_prefetch = 0 : i64, scratch_operands = 0 : i64, tpu.core_type = #tpu.core_type<tc>, window_params = [{transform_indices = @transform_0, window_bounds = array<i64: 32, 128>}, {pipeline_mode = #tpu.pipeline_mode<synchronous>, transform_indices = @transform_1, window_bounds = array<i64: 4, 32, 32>}, {pipeline_mode = #tpu.pipeline_mode<synchronous>, transform_indices = @transform_2, window_bounds = array<i64: 4, 32, 1>}, {transform_indices = @transform_3, window_bounds = array<i64: 1, 128>}]} {
    %c0 = arith.constant 0 : index
    %c0_0 = arith.constant 0 : index
    %c0_1 = arith.constant 0 : index
    %0 = vector.load %arg2[%c0, %c0_0, %c0_1] : memref<4x32x32xf32, #tpu.memory_space<vmem>>, vector<1x32x32xf32>
    %1 = vector.shape_cast %0 : vector<1x32x32xf32> to vector<32x32xf32>
    %c0_2 = arith.constant 0 : index
    %c0_3 = arith.constant 0 : index
    %2 = vector.load %arg1[%c0_2, %c0_3] : memref<32x128xf32, #tpu.memory_space<vmem>>, vector<32x128xf32>
    %cst = arith.constant dense<0.000000e+00> : vector<32x128xf32>
    %3 = tpu.matmul %1, %2, %cst {dimension_numbers = #tpu.dot_dimension_numbers<[1], [0], [0], [1], [0, 0, 1, 1], [], []>} : vector<32x32xf32>, vector<32x128xf32>, vector<32x128xf32> -> vector<32x128xf32>
    %c0_4 = arith.constant 0 : index
    %c0_5 = arith.constant 0 : index
    %c0_6 = arith.constant 0 : index
    %4 = vector.load %arg3[%c0_4, %c0_5, %c0_6] : memref<4x32x1xf32, #tpu.memory_space<vmem>>, vector<1x32x1xf32>
    %5 = vector.shape_cast %4 : vector<1x32x1xf32> to vector<32x1xf32>
    %6 = vector.broadcast %5 : vector<32x1xf32> to vector<32x128xf32>
    %7 = arith.addf %3, %6 : vector<32x128xf32>
    %cst_7 = arith.constant 0.000000e+00 : f32
    %8 = vector.broadcast %cst_7 : f32 to vector<32x128xf32>
    %9 = arith.maximumf %7, %8 : vector<32x128xf32>
    %c1 = arith.constant 1 : index
    %c0_8 = arith.constant 0 : index
    %c0_9 = arith.constant 0 : index
    %10 = vector.load %arg2[%c1, %c0_8, %c0_9] : memref<4x32x32xf32, #tpu.memory_space<vmem>>, vector<1x32x32xf32>
    %11 = vector.shape_cast %10 : vector<1x32x32xf32> to vector<32x32xf32>
    %cst_10 = arith.constant dense<0.000000e+00> : vector<32x128xf32>
    %12 = tpu.matmul %11, %9, %cst_10 {dimension_numbers = #tpu.dot_dimension_numbers<[1], [0], [0], [1], [0, 0, 1, 1], [], []>} : vector<32x32xf32>, vector<32x128xf32>, vector<32x128xf32> -> vector<32x128xf32>
    %c1_11 = arith.constant 1 : index
    %c0_12 = arith.constant 0 : index
    %c0_13 = arith.constant 0 : index
    %13 = vector.load %arg3[%c1_11, %c0_12, %c0_13] : memref<4x32x1xf32, #tpu.memory_space<vmem>>, vector<1x32x1xf32>
    %14 = vector.shape_cast %13 : vector<1x32x1xf32> to vector<32x1xf32>
    %15 = vector.broadcast %14 : vector<32x1xf32> to vector<32x128xf32>
    %16 = arith.addf %12, %15 : vector<32x128xf32>
    %cst_14 = arith.constant 0.000000e+00 : f32
    %17 = vector.broadcast %cst_14 : f32 to vector<32x128xf32>
    %18 = arith.maximumf %16, %17 : vector<32x128xf32>
    %c2 = arith.constant 2 : index
    %c0_15 = arith.constant 0 : index
    %c0_16 = arith.constant 0 : index
    %19 = vector.load %arg2[%c2, %c0_15, %c0_16] : memref<4x32x32xf32, #tpu.memory_space<vmem>>, vector<1x32x32xf32>
    %20 = vector.shape_cast %19 : vector<1x32x32xf32> to vector<32x32xf32>
    %cst_17 = arith.constant dense<0.000000e+00> : vector<32x128xf32>
    %21 = tpu.matmul %20, %18, %cst_17 {dimension_numbers = #tpu.dot_dimension_numbers<[1], [0], [0], [1], [0, 0, 1, 1], [], []>} : vector<32x32xf32>, vector<32x128xf32>, vector<32x128xf32> -> vector<32x128xf32>
    %c2_18 = arith.constant 2 : index
    %c0_19 = arith.constant 0 : index
    %c0_20 = arith.constant 0 : index
    %22 = vector.load %arg3[%c2_18, %c0_19, %c0_20] : memref<4x32x1xf32, #tpu.memory_space<vmem>>, vector<1x32x1xf32>
    %23 = vector.shape_cast %22 : vector<1x32x1xf32> to vector<32x1xf32>
    %24 = vector.broadcast %23 : vector<32x1xf32> to vector<32x128xf32>
    %25 = arith.addf %21, %24 : vector<32x128xf32>
    %cst_21 = arith.constant 0.000000e+00 : f32
    %26 = vector.broadcast %cst_21 : f32 to vector<32x128xf32>
    %27 = arith.maximumf %25, %26 : vector<32x128xf32>
    %c3 = arith.constant 3 : index
    %c0_22 = arith.constant 0 : index
    %c0_23 = arith.constant 0 : index
    %28 = vector.load %arg2[%c3, %c0_22, %c0_23] : memref<4x32x32xf32, #tpu.memory_space<vmem>>, vector<1x32x32xf32>
    %29 = vector.shape_cast %28 : vector<1x32x32xf32> to vector<32x32xf32>
    %cst_24 = arith.constant dense<0.000000e+00> : vector<32x128xf32>
    %30 = tpu.matmul %29, %27, %cst_24 {dimension_numbers = #tpu.dot_dimension_numbers<[1], [0], [0], [1], [0, 0, 1, 1], [], []>} : vector<32x32xf32>, vector<32x128xf32>, vector<32x128xf32> -> vector<32x128xf32>
    %31 = vector.extract_strided_slice %30 {offsets = [0, 0], sizes = [1, 128], strides = [1, 1]} : vector<32x128xf32> to vector<1x128xf32>
    %c3_25 = arith.constant 3 : index
    %c0_26 = arith.constant 0 : index
    %c0_27 = arith.constant 0 : index
    %32 = vector.load %arg3[%c3_25, %c0_26, %c0_27] : memref<4x32x1xf32, #tpu.memory_space<vmem>>, vector<1x1x1xf32>
    %33 = vector.shape_cast %32 : vector<1x1x1xf32> to vector<1x1xf32>
    %34 = vector.broadcast %33 : vector<1x1xf32> to vector<1x128xf32>
    %35 = arith.addf %31, %34 : vector<1x128xf32>
    %36 = math.tanh %35 : vector<1x128xf32>
    %c0_28 = arith.constant 0 : index
    %c0_29 = arith.constant 0 : index
    %37 = vector.load %arg4[%c0_28, %c0_29] : memref<1x128xf32, #tpu.memory_space<vmem>>, vector<1x128xf32>
    tpu.vector_store %arg4[%c0_28, %c0_29], %36 {strides = array<i32>} : memref<1x128xf32, #tpu.memory_space<vmem>>, vector<1x128xf32>,
    return
  }
  func.func @transform_0(%arg0: i32) -> (i32, i32) {
    %c0_i32 = arith.constant 0 : i32
    %c0_i32_0 = arith.constant 0 : i32
    return %c0_i32, %arg0 : i32, i32
  }
  func.func @transform_1(%arg0: i32) -> (i32, i32, i32) {
    %c0_i32 = arith.constant 0 : i32
    %c0_i32_0 = arith.constant 0 : i32
    %c0_i32_1 = arith.constant 0 : i32
    %c0_i32_2 = arith.constant 0 : i32
    return %c0_i32, %c0_i32_0, %c0_i32_1 : i32, i32, i32
  }
  func.func @transform_2(%arg0: i32) -> (i32, i32, i32) {
    %c0_i32 = arith.constant 0 : i32
    %c0_i32_0 = arith.constant 0 : i32
    %c0_i32_1 = arith.constant 0 : i32
    %c0_i32_2 = arith.constant 0 : i32
    return %c0_i32, %c0_i32_0, %c0_i32_1 : i32, i32, i32
  }
  func.func @transform_3(%arg0: i32) -> (i32, i32) {
    %c0_i32 = arith.constant 0 : i32
    %c0_i32_0 = arith.constant 0 : i32
    return %c0_i32, %arg0 : i32, i32
  }
}

</mosaic_0001>

<llo_original>
// kernel: tpu_custom_call.1
$region0: #{tpu_custom_call.1}
  #allocation0 [shape = 'u32[]', space=smem, size = 0x4, offset = 0x4, fixed_abs, tag = 'smem constant byte address 0x4 - core index']
  #allocation1 [shape = 'u32[144,128]{1,0:T(1,128)}', space=vmem, size = 0x12000, scoped, tag = 'internal scratch']
  %s0 = inlined_call_operand.hbm [shape: f32[32,128], index: 0, kind: input, shape index: {}]
  %s1 = inlined_call_operand.vmem [shape: f32[4,32,32], index: 1, kind: input, shape index: {}]
  %s2 = inlined_call_operand.vmem [shape: f32[4,32,1], index: 2, kind: input, shape index: {}]
  %s3 = inlined_call_operand.hbm [shape: f32[1,128], index: 3, kind: output, shape index: {}]
  %s4 = sld [smem:[#allocation0]]
  $region26: #{tpu_custom_call.1} parent=0
    _
  %s6 = ssub.s32 1, %s4
  %s7 = scalar_select 0, %s6, %s4
  $region1: #{tpu_custom_call.1} parent=0
    #allocation2 [shape = 'u8[16384]{0}', space=vmem, size = 0x4000, scoped, tag = 'input window, operand 0, single buffered']
    #allocation3 [shape = 's32[1]{0}', space=sflag, size = 0x4, scoped, tag = 'scoped memory for tpu_custom_call.1']
    #allocation4 [shape = 's32[1]{0}', space=sflag, size = 0x4, scoped, tag = 'scoped memory for tpu_custom_call.1']
    #allocation5 [shape = 'u8[512]{0}', space=vmem, size = 0x400, scoped, tag = 'output window, operand 0, single buffered']
    %8 = vsyncpa [#allocation3], 0
    %9 = vsyncpa [#allocation4], 0
    // Predicated region
    $region2: #{tpu_custom_call.1} parent=1 // pred_check
      _
    $region3: #{tpu_custom_call.1} parent=1 // pred_check_branch
      %11 = sbr.rel (0) target = $region5
    $region4: #{tpu_custom_call.1} parent=1 // pred_region
      %s13 = ssub.s32 512, 512
      %14 = vsyncadd [#allocation3], %s13
      %s15 = sshll.u32 [#allocation2], 4
      %s16 = int_to_ptr.vmem [resolvable:$true] %s15
      %21 = dma.hbm_to_vmem [thread:$0]  %s0, 512, %s16, [#allocation3], 128, 128, 8
    $region5: #{tpu_custom_call.1} parent=1 // pred_fallthru
      _
    // Predicated region
    $region6: #{tpu_custom_call.1} parent=1 // pred_check
      _
    $region7: #{tpu_custom_call.1} parent=1 // pred_check_branch
      %23 = sbr.rel (0) target = $region9
    $region8: #{tpu_custom_call.1} parent=1 // pred_region
      _
    $region9: #{tpu_custom_call.1} parent=1 // pred_fallthru
      _
    // Predicated region
    $region10: #{tpu_custom_call.1} parent=1 // pred_check
      _
    $region11: #{tpu_custom_call.1} parent=1 // pred_check_branch
      %25 = sbr.rel (0) target = $region13
    $region12: #{tpu_custom_call.1} parent=1 // pred_region
      _
    $region13: #{tpu_custom_call.1} parent=1 // pred_fallthru
      _
    // Predicated region
    $region14: #{tpu_custom_call.1} parent=1 // pred_check
      _
    $region15: #{tpu_custom_call.1} parent=1 // pred_check_branch
      %27 = sbr.rel (0) target = $region17
    $region16: #{tpu_custom_call.1} parent=1 // pred_region
      %28 = dma.done [#allocation3], 512
    $region17: #{tpu_custom_call.1} parent=1 // pred_fallthru
      _
    %v29 = vld [vmem:[%s1] sm:$0xff]
    %v30 = vld [vmem:[%s1 + $0x8] sm:$0xff]
    %v31 = vld [vmem:[%s1 + $0x10] sm:$0xff]
    %v32 = vld [vmem:[%s1 + $0x18] sm:$0xff]
    %v33 = vld [vmem:[#allocation2] sm:$0xff]
    %v34 = vld [vmem:[#allocation2 + $0x8] sm:$0xff]
    %v35 = vld [vmem:[#allocation2 + $0x10] sm:$0xff]
    %v36 = vld [vmem:[#allocation2 + $0x18] sm:$0xff]
    %v37 = vld [vmem:[%s2] sm:$0xff]
    %v38 = vld [vmem:[%s2 + $0x8] sm:$0xff]
    %v39 = vld [vmem:[%s2 + $0x10] sm:$0xff]
    %v40 = vld [vmem:[%s2 + $0x18] sm:$0xff]
    %42 = vset.pattern.permute.xlu0 0
    %43 = vperm.xlu0 %42, %v37
    %v44 = vpop.permute.xlu0 %43
    %47 = vset.pattern.permute.xlu0 0
    %48 = vperm.xlu0 %47, %v38
    %v49 = vpop.permute.xlu0 %48
    %52 = vset.pattern.permute.xlu0 0
    %53 = vperm.xlu0 %52, %v39
    %v54 = vpop.permute.xlu0 %53
    %57 = vset.pattern.permute.xlu0 0
    %58 = vperm.xlu0 %57, %v40
    %v59 = vpop.permute.xlu0 %58
    %vm61 = vcmask 261120
    %v63 = vsel %vm61, %v29, 0
    %v66 = vsel %vm61, %v30, 0
    %v69 = vsel %vm61, %v31, 0
    %v72 = vsel %vm61, %v32, 0
    %74 = vmatprep.subr.mxu0 0.0
    %75 = vmatpush1.msra.mxu0 %v33
    %76 = vmatprep.subr.mxu0 0.0
    %77 = vmatpush1.msra.mxu0 %v34
    %78 = vmatprep.subr.mxu0 0.0
    %79 = vmatpush1.msra.mxu0 %v35
    %80 = vmatprep.subr.mxu0 0.0
    %81 = vmatpush1.msra.mxu0 %v36
    %82 = vmatprep.subr.mxu0 0.0
    %83 = vmatpush1.msra.mxu0 0.0
    %84 = vmatprep.subr.mxu0 0.0
    %85 = vmatpush1.msra.mxu0 0.0
    %86 = vmatprep.subr.mxu0 0.0
    %87 = vmatpush1.msra.mxu0 0.0
    %88 = vmatprep.subr.mxu0 0.0
    %89 = vmatpush1.msra.mxu0 0.0
    %90 = vmatprep.subr.mxu0 0.0
    %91 = vmatpush1.msra.mxu0 0.0
    %92 = vmatprep.subr.mxu0 0.0
    %93 = vmatpush1.msra.mxu0 0.0
    %94 = vmatprep.subr.mxu0 0.0
    %95 = vmatpush1.msra.mxu0 0.0
    %96 = vmatprep.subr.mxu0 0.0
    %97 = vmatpush1.msra.mxu0 0.0
    %98 = vmatprep.subr.mxu0 0.0
    %99 = vmatpush1.msra.mxu0 0.0
    %100 = vmatprep.subr.mxu0 0.0
    %101 = vmatpush1.msra.mxu0 0.0
    %102 = vmatprep.subr.mxu0 0.0
    %103 = vmatpush1.msra.mxu0 0.0
    %104 = vmatprep.subr.mxu0 0.0
    %105 = vmatpush1.msra.mxu0 0.0
    %106 = vmatprep.subr.mxu0 0.0
    %107 = vmatpush1.msra.mxu0 0.0
    %108 = vmatprep.subr.mxu0 0.0
    %109 = vmatpush1.msra.mxu0 0.0
    %110 = vmatprep.subr.mxu0 0.0
    %111 = vmatpush1.msra.mxu0 0.0
    %112 = vmatprep.subr.mxu0 0.0
    %113 = vmatpush1.msra.mxu0 0.0
    %114 = vmatprep.subr.mxu0 0.0
    %115 = vmatpush1.msra.mxu0 0.0
    %116 = vmatprep.subr.mxu0 0.0
    %117 = vmatpush1.msra.mxu0 0.0
    %118 = vmatprep.subr.mxu0 0.0
    %119 = vmatpush1.msra.mxu0 0.0
    %120 = vmatprep.subr.mxu0 0.0
    %121 = vmatpush1.msra.mxu0 0.0
    %122 = vmatprep.subr.mxu0 0.0
    %123 = vmatpush1.msra.mxu0 0.0
    %124 = vmatprep.subr.mxu0 0.0
    %125 = vmatpush1.msra.mxu0 0.0
    %126 = vmatprep.subr.mxu0 0.0
    %127 = vmatpush1.msra.mxu0 0.0
    %128 = vmatprep.subr.mxu0 0.0
    %129 = vmatpush1.msra.mxu0 0.0
    %130 = vmatprep.subr.mxu0 0.0
    %131 = vmatpush1.msra.mxu0 0.0
    %132 = vmatprep.subr.mxu0 0.0
    %133 = vmatpush1.msra.mxu0 0.0
    %134 = vmatprep.subr.mxu0 0.0
    %135 = vmatpush1.msra.mxu0 0.0
    %136 = vmatprep.subr.mxu0 0.0
    %137 = vmatpush1.msra.mxu0 0.0
    %138 = vmatprep.mubr.f32.mxu0 0.0
    %139 = vmatmul.mubr.f32.gmra.mrb[0].mxu0 %v63
    %v140 = vpop.f32.mrb[0].mxu0
    %v141 = vadd.f32 %v44, %v140
    %v142 = vpop.f32.mrb[0].mxu0
    %143 = vmatprep.mubr.f32.mxu0 0.0
    %144 = vmatmul.mubr.f32.gmra.mrb[0].mxu0 %v66
    %v145 = vpop.f32.mrb[0].mxu0
    %v146 = vadd.f32 %v49, %v145
    %v147 = vpop.f32.mrb[0].mxu0
    %148 = vmatprep.mubr.f32.mxu0 0.0
    %149 = vmatmul.mubr.f32.gmra.mrb[0].mxu0 %v69
    %v150 = vpop.f32.mrb[0].mxu0
    %v151 = vadd.f32 %v54, %v150
    %v152 = vpop.f32.mrb[0].mxu0
    %153 = vmatprep.mubr.f32.mxu0 0.0
    %154 = vmatmul.mubr.f32.gmra.mrb[0].mxu0 %v72
    %v155 = vpop.f32.mrb[0].mxu0
    %v156 = vadd.f32 %v59, %v155
    %v157 = vpop.f32.mrb[0].mxu0
    %158 = vdwg.mxu0
    %v159 = vmax.f32 %v141, 0.0
    %v160 = vmax.f32 %v146, 0.0
    %v161 = vmax.f32 %v151, 0.0
    %v162 = vmax.f32 %v156, 0.0
    %s163 = scalar_lea.vmem %s1, 32
    %v164 = vld [vmem:[%s163] sm:$0xff]
    %v165 = vld [vmem:[%s163 + $0x8] sm:$0xff]
    %v166 = vld [vmem:[%s163 + $0x10] sm:$0xff]
    %v167 = vld [vmem:[%s163 + $0x18] sm:$0xff]
    %s168 = scalar_lea.vmem %s2, 32
    %v169 = vld [vmem:[%s168] sm:$0xff]
    %v170 = vld [vmem:[%s168 + $0x8] sm:$0xff]
    %v171 = vld [vmem:[%s168 + $0x10] sm:$0xff]
    %v172 = vld [vmem:[%s168 + $0x18] sm:$0xff]
    %174 = vset.pattern.permute.xlu0 0
    %175 = vperm.xlu0 %174, %v169
    %v176 = vpop.permute.xlu0 %175
    %179 = vset.pattern.permute.xlu0 0
    %180 = vperm.xlu0 %179, %v170
    %v181 = vpop.permute.xlu0 %180
    %184 = vset.pattern.permute.xlu0 0
    %185 = vperm.xlu0 %184, %v171
    %v186 = vpop.permute.xlu0 %185
    %189 = vset.pattern.permute.xlu0 0
    %190 = vperm.xlu0 %189, %v172
    %v191 = vpop.permute.xlu0 %190
    %v194 = vsel %vm61, %v164, 0
    %v197 = vsel %vm61, %v165, 0
    %v200 = vsel %vm61, %v166, 0
    %v203 = vsel %vm61, %v167, 0
    %205 = vmatprep.subr.mxu0 0.0
    %206 = vmatpush1.msra.mxu0 %v159
    %207 = vmatprep.subr.mxu0 0.0
    %208 = vmatpush1.msra.mxu0 %v160
    %209 = vmatprep.subr.mxu0 0.0
    %210 = vmatpush1.msra.mxu0 %v161
    %211 = vmatprep.subr.mxu0 0.0
    %212 = vmatpush1.msra.mxu0 %v162
    %213 = vmatprep.subr.mxu0 0.0
    %214 = vmatpush1.msra.mxu0 0.0
    %215 = vmatprep.subr.mxu0 0.0
    %216 = vmatpush1.msra.mxu0 0.0
    %217 = vmatprep.subr.mxu0 0.0
    %218 = vmatpush1.msra.mxu0 0.0
    %219 = vmatprep.subr.mxu0 0.0
    %220 = vmatpush1.msra.mxu0 0.0
    %221 = vmatprep.subr.mxu0 0.0
    %222 = vmatpush1.msra.mxu0 0.0
    %223 = vmatprep.subr.mxu0 0.0
    %224 = vmatpush1.msra.mxu0 0.0
    %225 = vmatprep.subr.mxu0 0.0
    %226 = vmatpush1.msra.mxu0 0.0
    %227 = vmatprep.subr.mxu0 0.0
    %228 = vmatpush1.msra.mxu0 0.0
    %229 = vmatprep.subr.mxu0 0.0
    %230 = vmatpush1.msra.mxu0 0.0
    %231 = vmatprep.subr.mxu0 0.0
    %232 = vmatpush1.msra.mxu0 0.0
    %233 = vmatprep.subr.mxu0 0.0
    %234 = vmatpush1.msra.mxu0 0.0
    %235 = vmatprep.subr.mxu0 0.0
    %236 = vmatpush1.msra.mxu0 0.0
    %237 = vmatprep.subr.mxu0 0.0
    %238 = vmatpush1.msra.mxu0 0.0
    %239 = vmatprep.subr.mxu0 0.0
    %240 = vmatpush1.msra.mxu0 0.0
    %241 = vmatprep.subr.mxu0 0.0
    %242 = vmatpush1.msra.mxu0 0.0
    %243 = vmatprep.subr.mxu0 0.0
    %244 = vmatpush1.msra.mxu0 0.0
    %245 = vmatprep.subr.mxu0 0.0
    %246 = vmatpush1.msra.mxu0 0.0
    %247 = vmatprep.subr.mxu0 0.0
    %248 = vmatpush1.msra.mxu0 0.0
    %249 = vmatprep.subr.mxu0 0.0
    %250 = vmatpush1.msra.mxu0 0.0
    %251 = vmatprep.subr.mxu0 0.0
    %252 = vmatpush1.msra.mxu0 0.0
    %253 = vmatprep.subr.mxu0 0.0
    %254 = vmatpush1.msra.mxu0 0.0
    %255 = vmatprep.subr.mxu0 0.0
    %256 = vmatpush1.msra.mxu0 0.0
    %257 = vmatprep.subr.mxu0 0.0
    %258 = vmatpush1.msra.mxu0 0.0
    %259 = vmatprep.subr.mxu0 0.0
    %260 = vmatpush1.msra.mxu0 0.0
    %261 = vmatprep.subr.mxu0 0.0
    %262 = vmatpush1.msra.mxu0 0.0
    %263 = vmatprep.subr.mxu0 0.0
    %264 = vmatpush1.msra.mxu0 0.0
    %265 = vmatprep.subr.mxu0 0.0
    %266 = vmatpush1.msra.mxu0 0.0
    %267 = vmatprep.subr.mxu0 0.0
    %268 = vmatpush1.msra.mxu0 0.0
    %269 = vmatprep.mubr.f32.mxu0 0.0
    %270 = vmatmul.mubr.f32.gmra.mrb[0].mxu0 %v194
    %v271 = vpop.f32.mrb[0].mxu0
    %v272 = vadd.f32 %v176, %v271
    %v273 = vpop.f32.mrb[0].mxu0
    %274 = vmatprep.mubr.f32.mxu0 0.0
    %275 = vmatmul.mubr.f32.gmra.mrb[0].mxu0 %v197
    %v276 = vpop.f32.mrb[0].mxu0
    %v277 = vadd.f32 %v181, %v276
    %v278 = vpop.f32.mrb[0].mxu0
    %279 = vmatprep.mubr.f32.mxu0 0.0
    %280 = vmatmul.mubr.f32.gmra.mrb[0].mxu0 %v200
    %v281 = vpop.f32.mrb[0].mxu0
    %v282 = vadd.f32 %v186, %v281
    %v283 = vpop.f32.mrb[0].mxu0
    %284 = vmatprep.mubr.f32.mxu0 0.0
    %285 = vmatmul.mubr.f32.gmra.mrb[0].mxu0 %v203
    %v286 = vpop.f32.mrb[0].mxu0
    %v287 = vadd.f32 %v191, %v286
    %v288 = vpop.f32.mrb[0].mxu0
    %289 = vdwg.mxu0
    %v290 = vmax.f32 %v272, 0.0
    %v291 = vmax.f32 %v277, 0.0
    %v292 = vmax.f32 %v282, 0.0
    %v293 = vmax.f32 %v287, 0.0
    %s294 = scalar_lea.vmem %s1, 64
    %v295 = vld [vmem:[%s294] sm:$0xff]
    %v296 = vld [vmem:[%s294 + $0x8] sm:$0xff]
    %v297 = vld [vmem:[%s294 + $0x10] sm:$0xff]
    %v298 = vld [vmem:[%s294 + $0x18] sm:$0xff]
    %s299 = scalar_lea.vmem %s2, 64
    %v300 = vld [vmem:[%s299] sm:$0xff]
    %v301 = vld [vmem:[%s299 + $0x8] sm:$0xff]
    %v302 = vld [vmem:[%s299 + $0x10] sm:$0xff]
    %v303 = vld [vmem:[%s299 + $0x18] sm:$0xff]
    %305 = vset.pattern.permute.xlu0 0
    %306 = vperm.xlu0 %305, %v300
    %v307 = vpop.permute.xlu0 %306
    %310 = vset.pattern.permute.xlu0 0
    %311 = vperm.xlu0 %310, %v301
    %v312 = vpop.permute.xlu0 %311
    %315 = vset.pattern.permute.xlu0 0
    %316 = vperm.xlu0 %315, %v302
    %v317 = vpop.permute.xlu0 %316
    %320 = vset.pattern.permute.xlu0 0
    %321 = vperm.xlu0 %320, %v303
    %v322 = vpop.permute.xlu0 %321
    %v325 = vsel %vm61, %v295, 0
    %v328 = vsel %vm61, %v296, 0
    %v331 = vsel %vm61, %v297, 0
    %v334 = vsel %vm61, %v298, 0
    %336 = vmatprep.subr.mxu0 0.0
    %337 = vmatpush1.msra.mxu0 %v290
    %338 = vmatprep.subr.mxu0 0.0
    %339 = vmatpush1.msra.mxu0 %v291
    %340 = vmatprep.subr.mxu0 0.0
    %341 = vmatpush1.msra.mxu0 %v292
    %342 = vmatprep.subr.mxu0 0.0
    %343 = vmatpush1.msra.mxu0 %v293
    %344 = vmatprep.subr.mxu0 0.0
    %345 = vmatpush1.msra.mxu0 0.0
    %346 = vmatprep.subr.mxu0 0.0
    %347 = vmatpush1.msra.mxu0 0.0
    %348 = vmatprep.subr.mxu0 0.0
    %349 = vmatpush1.msra.mxu0 0.0
    %350 = vmatprep.subr.mxu0 0.0
    %351 = vmatpush1.msra.mxu0 0.0
    %352 = vmatprep.subr.mxu0 0.0
    %353 = vmatpush1.msra.mxu0 0.0
    %354 = vmatprep.subr.mxu0 0.0
    %355 = vmatpush1.msra.mxu0 0.0
    %356 = vmatprep.subr.mxu0 0.0
    %357 = vmatpush1.msra.mxu0 0.0
    %358 = vmatprep.subr.mxu0 0.0
    %359 = vmatpush1.msra.mxu0 0.0
    %360 = vmatprep.subr.mxu0 0.0
    %361 = vmatpush1.msra.mxu0 0.0
    %362 = vmatprep.subr.mxu0 0.0
    %363 = vmatpush1.msra.mxu0 0.0
    %364 = vmatprep.subr.mxu0 0.0
    %365 = vmatpush1.msra.mxu0 0.0
    %366 = vmatprep.subr.mxu0 0.0
    %367 = vmatpush1.msra.mxu0 0.0
    %368 = vmatprep.subr.mxu0 0.0
    %369 = vmatpush1.msra.mxu0 0.0
    %370 = vmatprep.subr.mxu0 0.0
    %371 = vmatpush1.msra.mxu0 0.0
    %372 = vmatprep.subr.mxu0 0.0
    %373 = vmatpush1.msra.mxu0 0.0
    %374 = vmatprep.subr.mxu0 0.0
    %375 = vmatpush1.msra.mxu0 0.0
    %376 = vmatprep.subr.mxu0 0.0
    %377 = vmatpush1.msra.mxu0 0.0
    %378 = vmatprep.subr.mxu0 0.0
    %379 = vmatpush1.msra.mxu0 0.0
    %380 = vmatprep.subr.mxu0 0.0
    %381 = vmatpush1.msra.mxu0 0.0
    %382 = vmatprep.subr.mxu0 0.0
    %383 = vmatpush1.msra.mxu0 0.0
    %384 = vmatprep.subr.mxu0 0.0
    %385 = vmatpush1.msra.mxu0 0.0
    %386 = vmatprep.subr.mxu0 0.0
    %387 = vmatpush1.msra.mxu0 0.0
    %388 = vmatprep.subr.mxu0 0.0
    %389 = vmatpush1.msra.mxu0 0.0
    %390 = vmatprep.subr.mxu0 0.0
    %391 = vmatpush1.msra.mxu0 0.0
    %392 = vmatprep.subr.mxu0 0.0
    %393 = vmatpush1.msra.mxu0 0.0
    %394 = vmatprep.subr.mxu0 0.0
    %395 = vmatpush1.msra.mxu0 0.0
    %396 = vmatprep.subr.mxu0 0.0
    %397 = vmatpush1.msra.mxu0 0.0
    %398 = vmatprep.subr.mxu0 0.0
    %399 = vmatpush1.msra.mxu0 0.0
    %400 = vmatprep.mubr.f32.mxu0 0.0
    %401 = vmatmul.mubr.f32.gmra.mrb[0].mxu0 %v325
    %v402 = vpop.f32.mrb[0].mxu0
    %v403 = vadd.f32 %v307, %v402
    %v404 = vpop.f32.mrb[0].mxu0
    %405 = vmatprep.mubr.f32.mxu0 0.0
    %406 = vmatmul.mubr.f32.gmra.mrb[0].mxu0 %v328
    %v407 = vpop.f32.mrb[0].mxu0
    %v408 = vadd.f32 %v312, %v407
    %v409 = vpop.f32.mrb[0].mxu0
    %410 = vmatprep.mubr.f32.mxu0 0.0
    %411 = vmatmul.mubr.f32.gmra.mrb[0].mxu0 %v331
    %v412 = vpop.f32.mrb[0].mxu0
    %v413 = vadd.f32 %v317, %v412
    %v414 = vpop.f32.mrb[0].mxu0
    %415 = vmatprep.mubr.f32.mxu0 0.0
    %416 = vmatmul.mubr.f32.gmra.mrb[0].mxu0 %v334
    %v417 = vpop.f32.mrb[0].mxu0
    %v418 = vadd.f32 %v322, %v417
    %v419 = vpop.f32.mrb[0].mxu0
    %420 = vdwg.mxu0
    %v421 = vmax.f32 %v403, 0.0
    %v422 = vmax.f32 %v408, 0.0
    %v423 = vmax.f32 %v413, 0.0
    %v424 = vmax.f32 %v418, 0.0
    %s425 = scalar_lea.vmem %s1, 96
    %v426 = vld [vmem:[%s425] sm:$0xff]
    %v427 = vld [vmem:[%s425 + $0x8] sm:$0xff]
    %v428 = vld [vmem:[%s425 + $0x10] sm:$0xff]
    %v429 = vld [vmem:[%s425 + $0x18] sm:$0xff]
    %v431 = vsel %vm61, %v426, 0
    %v434 = vsel %vm61, %v427, 0
    %v437 = vsel %vm61, %v428, 0
    %v440 = vsel %vm61, %v429, 0
    %442 = vmatprep.subr.mxu0 0.0
    %443 = vmatpush1.msra.mxu0 %v421
    %444 = vmatprep.subr.mxu0 0.0
    %445 = vmatpush1.msra.mxu0 %v422
    %446 = vmatprep.subr.mxu0 0.0
    %447 = vmatpush1.msra.mxu0 %v423
    %448 = vmatprep.subr.mxu0 0.0
    %449 = vmatpush1.msra.mxu0 %v424
    %450 = vmatprep.subr.mxu0 0.0
    %451 = vmatpush1.msra.mxu0 0.0
    %452 = vmatprep.subr.mxu0 0.0
    %453 = vmatpush1.msra.mxu0 0.0
    %454 = vmatprep.subr.mxu0 0.0
    %455 = vmatpush1.msra.mxu0 0.0
    %456 = vmatprep.subr.mxu0 0.0
    %457 = vmatpush1.msra.mxu0 0.0
    %458 = vmatprep.subr.mxu0 0.0
    %459 = vmatpush1.msra.mxu0 0.0
    %460 = vmatprep.subr.mxu0 0.0
    %461 = vmatpush1.msra.mxu0 0.0
    %462 = vmatprep.subr.mxu0 0.0
    %463 = vmatpush1.msra.mxu0 0.0
    %464 = vmatprep.subr.mxu0 0.0
    %465 = vmatpush1.msra.mxu0 0.0
    %466 = vmatprep.subr.mxu0 0.0
    %467 = vmatpush1.msra.mxu0 0.0
    %468 = vmatprep.subr.mxu0 0.0
    %469 = vmatpush1.msra.mxu0 0.0
    %470 = vmatprep.subr.mxu0 0.0
    %471 = vmatpush1.msra.mxu0 0.0
    %472 = vmatprep.subr.mxu0 0.0
    %473 = vmatpush1.msra.mxu0 0.0
    %474 = vmatprep.subr.mxu0 0.0
    %475 = vmatpush1.msra.mxu0 0.0
    %476 = vmatprep.subr.mxu0 0.0
    %477 = vmatpush1.msra.mxu0 0.0
    %478 = vmatprep.subr.mxu0 0.0
    %479 = vmatpush1.msra.mxu0 0.0
    %480 = vmatprep.subr.mxu0 0.0
    %481 = vmatpush1.msra.mxu0 0.0
    %482 = vmatprep.subr.mxu0 0.0
    %483 = vmatpush1.msra.mxu0 0.0
    %484 = vmatprep.subr.mxu0 0.0
    %485 = vmatpush1.msra.mxu0 0.0
    %486 = vmatprep.subr.mxu0 0.0
    %487 = vmatpush1.msra.mxu0 0.0
    %488 = vmatprep.subr.mxu0 0.0
    %489 = vmatpush1.msra.mxu0 0.0
    %490 = vmatprep.subr.mxu0 0.0
    %491 = vmatpush1.msra.mxu0 0.0
    %492 = vmatprep.subr.mxu0 0.0
    %493 = vmatpush1.msra.mxu0 0.0
    %494 = vmatprep.subr.mxu0 0.0
    %495 = vmatpush1.msra.mxu0 0.0
    %496 = vmatprep.subr.mxu0 0.0
    %497 = vmatpush1.msra.mxu0 0.0
    %498 = vmatprep.subr.mxu0 0.0
    %499 = vmatpush1.msra.mxu0 0.0
    %500 = vmatprep.subr.mxu0 0.0
    %501 = vmatpush1.msra.mxu0 0.0
    %502 = vmatprep.subr.mxu0 0.0
    %503 = vmatpush1.msra.mxu0 0.0
    %504 = vmatprep.subr.mxu0 0.0
    %505 = vmatpush1.msra.mxu0 0.0
    %506 = vmatprep.mubr.f32.mxu0 0.0
    %507 = vmatmul.mubr.f32.gmra.mrb[0].mxu0 %v431
    %v508 = vpop.f32.mrb[0].mxu0
    %v509 = vadd.f32 0.0, %v508
    %v510 = vpop.f32.mrb[0].mxu0
    %511 = vmatprep.mubr.f32.mxu0 0.0
    %512 = vmatmul.mubr.f32.gmra.mrb[0].mxu0 %v434
    %v513 = vpop.f32.mrb[0].mxu0
    %v514 = vpop.f32.mrb[0].mxu0
    %515 = vmatprep.mubr.f32.mxu0 0.0
    %516 = vmatmul.mubr.f32.gmra.mrb[0].mxu0 %v437
    %v517 = vpop.f32.mrb[0].mxu0
    %v518 = vpop.f32.mrb[0].mxu0
    %519 = vmatprep.mubr.f32.mxu0 0.0
    %520 = vmatmul.mubr.f32.gmra.mrb[0].mxu0 %v440
    %v521 = vpop.f32.mrb[0].mxu0
    %v522 = vpop.f32.mrb[0].mxu0
    %523 = vdwg.mxu0
    %s524 = scalar_lea.vmem %s2, 96
    %v525 = vld [vmem:[%s524] sm:$0x1]
    %527 = vset.pattern.permute.xlu0 0
    %528 = vperm.xlu0 %527, %v525
    %v529 = vpop.permute.xlu0 %528
    %v531 = vadd.f32 %v509, %v529
    %v532 = vtanh.pop %v531
    %533 = vst [vmem:[#allocation5] sm:$0x1] %v532
    // Predicated region
    $region18: #{tpu_custom_call.1} parent=1 // pred_check
      _
    $region19: #{tpu_custom_call.1} parent=1 // pred_check_branch
      %535 = sbr.rel (0) target = $region21
    $region20: #{tpu_custom_call.1} parent=1 // pred_region
      %s537 = ssub.s32 16, 16
      %538 = vsyncadd [#allocation4], %s537
      %s540 = sshll.u32 [#allocation5], 4
      %s541 = int_to_ptr.vmem [resolvable:$true] %s540
      %543 = dma.vmem_to_hbm [thread:$0]  %s541, 16, %s3, [#allocation4]
    $region21: #{tpu_custom_call.1} parent=1 // pred_fallthru
      _
    // Predicated region
    $region22: #{tpu_custom_call.1} parent=1 // pred_check
      _
    $region23: #{tpu_custom_call.1} parent=1 // pred_check_branch
      %545 = sbr.rel (0) target = $region25
    $region24: #{tpu_custom_call.1} parent=1 // pred_region
      %546 = dma.done [#allocation4], 16
    $region25: #{tpu_custom_call.1} parent=1 // pred_fallthru
      _
    %547 = vsyncpa [#allocation3], 1
    %548 = vsyncpa [#allocation4], 1

</llo_original>
